<compile_context>
chip_gen: v5e
topology: v5e:2x2
jax: 0.10.0
libtpu: 0.0.40
codegen_flags: <defaults>
</compile_context>

<pallas_src>
import jax
import jax.numpy as jnp
from jax.experimental import pallas as pl
from jax.experimental.pallas import tpu as pltpu

_LANE = 128


# ---------------------------------------------------------------------------
# Hardware / tiling helpers
# ---------------------------------------------------------------------------
def _vmem_capacity_bytes():
    """Physical VMEM per TensorCore; conservative 64 MiB (v7x) fallback."""
    try:
        cap = int(pltpu.get_tpu_info().vmem_capacity_bytes)
        return max(32 * 1024 * 1024, min(cap, 256 * 1024 * 1024))
    except Exception:
        return 64 * 1024 * 1024


def _min_sublane(dtype):
    """Minimum efficient sublane pack: f32 -> 8, bf16 -> 16, int8/fp8 -> 32."""
    return {4: 8, 2: 16, 1: 32}.get(jnp.dtype(dtype).itemsize, 8)


def _divisors(n):
    out, d = set(), 1
    while d * d <= n:
        if n % d == 0:
            out.add(d)
            out.add(n // d)
        d += 1
    return sorted(out)


def _largest_divisor(n, cap, multiple_of=1):
    """Largest d | n with d <= cap and d % multiple_of == 0, else None."""
    best = None
    for d in _divisors(n):
        if d <= cap and d % multiple_of == 0:
            best = d
    return best


def _pick_batch_tile(B, bytes_per_batch, budget):
    """Largest divisor of B whose slab fits `budget`, preferring >=2 grid steps."""
    fitting = [d for d in _divisors(B) if d * bytes_per_batch <= budget] or [1]
    two_steps = [d for d in fitting if B // d >= 2]
    return max(two_steps) if two_steps else max(fitting)


# ---------------------------------------------------------------------------
# Fused single-pass kernel: read x once, gate, multiply, write once.
# ---------------------------------------------------------------------------
def _fused_kernel(x_ref, w1t_ref, b1_ref, w2t_ref, b2_ref, o_ref):
    x = x_ref[...]                                                   # (TB, C, L)
    # f32 spatial sum; the 1/L mean scale is already folded into w1t.
    # TODO(synk): on v7x, a VALU/MXU partial-sum path would offload the XLU reduce.
    s = jnp.sum(x, axis=2, dtype=jnp.float32)                        # (TB, C)
    h = jnp.dot(s, w1t_ref[...], preferred_element_type=jnp.float32) + b1_ref[...]
    h = jnp.maximum(h, 0.0)
    z = jnp.dot(h, w2t_ref[...], preferred_element_type=jnp.float32) + b2_ref[...]
    g = jax.nn.sigmoid(z)                                            # (TB, C) f32
    # Native-dtype broadcast multiply (no full-tile f32 upcast kept live).
    o_ref[...] = x * g[:, :, None].astype(x.dtype)


# ---------------------------------------------------------------------------
# Fallback pass 1: tiled sum over L (f32 accumulator) + tiny MLP -> gate.
# ---------------------------------------------------------------------------
def _gate_kernel(x_ref, w1t_ref, b1_ref, w2t_ref, b2_ref, g_ref, acc_ref):
    l = pl.program_id(1)

    @pl.when(l == 0)
    def _():
        acc_ref[...] = jnp.zeros_like(acc_ref)

    acc_ref[...] += jnp.sum(x_ref[...], axis=2, dtype=jnp.float32)

    @pl.when(l == pl.num_programs(1) - 1)
    def _():
        s = acc_ref[...]                                             # (TB1, C)
        h = jnp.dot(s, w1t_ref[...], preferred_element_type=jnp.float32)
        h = jnp.maximum(h + b1_ref[...], 0.0)
        z = jnp.dot(h, w2t_ref[...], preferred_element_type=jnp.float32)
        g_ref[...] = jax.nn.sigmoid(z + b2_ref[...]).astype(g_ref.dtype)


# ---------------------------------------------------------------------------
# Fallback pass 2: o = x * g broadcast over L.  Pure memory traffic.
# ---------------------------------------------------------------------------
def _scale_kernel(x_ref, g_ref, o_ref):
    # x_ref: (1, TC, TL); g_ref: (1, TC, 1) in x.dtype (native-dtype multiply).
    o_ref[...] = x_ref[...] * g_ref[...]


# ---------------------------------------------------------------------------
# Wrapper
# ---------------------------------------------------------------------------
def se_forward(x, w1, b1, w2, b2):
    """x: (B, Cin, L); w1: (H, Cin); b1: (H,); w2: (Cout, H); b2: (Cout,)."""
    B, C, L = x.shape
    H = w1.shape[0]
    Cout = w2.shape[0]
    assert w1.shape == (H, C) and w2.shape == (Cout, H)
    assert C == Cout, "SE gating requires Cin == Cout for the broadcasted multiply"

    itemsize = jnp.dtype(x.dtype).itemsize

    # Glue: pre-transpose weights (row-major MXU matmuls), fold the 1/L mean
    # scale into W1, 2-D biases, all f32.
    w1t = jnp.transpose(w1).astype(jnp.float32) / jnp.float32(L)     # (C, H)
    w2t = jnp.transpose(w2).astype(jnp.float32)                      # (H, C)
    b1_2d = b1.reshape(1, H).astype(jnp.float32)
    b2_2d = b2.reshape(1, C).astype(jnp.float32)

    # Generation-aware VMEM budgets (v7x: 64 MiB physical; v5e/v6e: 128 MiB).
    vmem_cap = _vmem_capacity_bytes()
    vmem_limit = min(vmem_cap * 3 // 4, 96 * 1024 * 1024)
    fused_slab_budget = vmem_limit // 6       # x + out slabs, each double-buffered
    pass_block_budget = vmem_limit // 12      # per-block budget in the 2-pass path

    bytes_per_batch = C * L * itemsize
    weight_bytes = (2 * C * H + H + C) * 4
    mlp_flops = 2 * B * C * H + 2 * B * H * C

    # ---- fused single-pass path: 2x B*C*L HBM traffic ----------------------
    if bytes_per_batch <= fused_slab_budget:
        TB = _pick_batch_tile(B, bytes_per_batch, fused_slab_budget)
        # TODO(synk): for L not a multiple of 128 a flattened (B, C*L) layout with an in-kernel gate repeat would give lane-dense stores.
        return pl.pallas_call(
            _fused_kernel,
            out_shape=jax.ShapeDtypeStruct((B, C, L), x.dtype),
            grid_spec=pltpu.PrefetchScalarGridSpec(
                num_scalar_prefetch=0,
                grid=(B // TB,),
                in_specs=[
                    pl.BlockSpec((TB, C, L), lambda b: (b, 0, 0)),    # x slab
                    pl.BlockSpec((C, H), lambda b: (0, 0)),           # w1^T / L
                    pl.BlockSpec((1, H), lambda b: (0, 0)),           # b1
                    pl.BlockSpec((H, C), lambda b: (0, 0)),           # w2^T
                    pl.BlockSpec((1, C), lambda b: (0, 0)),           # b2
                ],
                out_specs=pl.BlockSpec((TB, C, L), lambda b: (b, 0, 0)),
            ),
            compiler_params=pltpu.CompilerParams(
                dimension_semantics=("parallel",),
                vmem_limit_bytes=vmem_limit,
            ),
            cost_estimate=pl.CostEstimate(
                flops=2 * B * C * L + mlp_flops,
                transcendentals=B * C,
                bytes_accessed=2 * B * C * L * itemsize + weight_bytes,
            ),
        )(x, w1t, b1_2d, w2t, b2_2d)

    # ---- two-pass fallback for large C*L slabs ------------------------------
    # Pass 1: gate.  Lane-dense L tiles within budget, budget-aware batch tile.
    cap_l1 = max(pass_block_budget // max(C * itemsize, 1), 1)
    TLr = _largest_divisor(L, cap=min(L, cap_l1), multiple_of=_LANE)
    if TLr is None:
        TLr = L  # TODO(synk): tile C (per-C-tile accumulation + separate MLP) when L has no 128-multiple divisor and C*L is huge.
    TB1 = _pick_batch_tile(B, C * TLr * itemsize, pass_block_budget)
    gate_grid = (B // TB1, L // TLr)

    gate = pl.pallas_call(
        _gate_kernel,
        out_shape=jax.ShapeDtypeStruct((B, C), x.dtype),
        grid_spec=pltpu.PrefetchScalarGridSpec(
            num_scalar_prefetch=0,
            grid=gate_grid,
            in_specs=[
                pl.BlockSpec((TB1, C, TLr), lambda b, l: (b, 0, l)),  # x
                pl.BlockSpec((C, H), lambda b, l: (0, 0)),            # w1^T / L
                pl.BlockSpec((1, H), lambda b, l: (0, 0)),            # b1
                pl.BlockSpec((H, C), lambda b, l: (0, 0)),            # w2^T
                pl.BlockSpec((1, C), lambda b, l: (0, 0)),            # b2
            ],
            out_specs=pl.BlockSpec((TB1, C), lambda b, l: (b, 0)),
            scratch_shapes=[pltpu.VMEM((TB1, C), jnp.float32)],
        ),
        compiler_params=pltpu.CompilerParams(
            dimension_semantics=("parallel", "arbitrary"),
            vmem_limit_bytes=vmem_limit,
        ),
        cost_estimate=pl.CostEstimate(
            flops=B * C * L + mlp_flops,
            transcendentals=B * C,
            bytes_accessed=B * C * L * itemsize + B * C * itemsize + weight_bytes,
        ),
    )(x, w1t, b1_2d, w2t, b2_2d)

    # (B, C) -> (B, C, 1): gate block gets legal last-two dims (TC, 1) and
    # broadcasts over L without any in-kernel relayout.
    gate3 = gate.reshape(B, C, 1)

    # Pass 2: scale.  dtype-aware channel tile, lane-dense L tile up to budget.
    sub = _min_sublane(x.dtype)
    TC = _largest_divisor(C, cap=min(C, 512), multiple_of=sub)
    if TC is None:
        TC = _largest_divisor(C, cap=min(C, 512), multiple_of=8)      # legality min
    if TC is None:
        TC = C                                                        # full extent
    cap_l2 = max(pass_block_budget // max(TC * itemsize, 1), 1)
    TL = _largest_divisor(L, cap=min(L, cap_l2), multiple_of=_LANE)
    if TL is None:
        TL = L  # TODO(synk): lane-dense flattened (B, C*L) layout + in-kernel gate repeat when L is not a multiple of 128.
    scale_grid = (B, C // TC, L // TL)

    out = pl.pallas_call(
        _scale_kernel,
        out_shape=jax.ShapeDtypeStruct((B, C, L), x.dtype),
        grid_spec=pltpu.PrefetchScalarGridSpec(
            num_scalar_prefetch=0,
            grid=scale_grid,
            in_specs=[
                pl.BlockSpec((1, TC, TL), lambda b, c, l: (b, c, l)),  # x
                pl.BlockSpec((1, TC, 1), lambda b, c, l: (b, c, 0)),   # gate
            ],
            out_specs=pl.BlockSpec((1, TC, TL), lambda b, c, l: (b, c, l)),
        ),
        compiler_params=pltpu.CompilerParams(
            dimension_semantics=("parallel", "parallel", "parallel"),
            vmem_limit_bytes=vmem_limit,
        ),
        cost_estimate=pl.CostEstimate(
            flops=B * C * L,
            transcendentals=0,
            bytes_accessed=2 * B * C * L * itemsize + B * C * itemsize,
        ),
    )(x, gate3)
    return out


def se_reference(x, w1, b1, w2, b2):
    s = jnp.mean(x.astype(jnp.float32), axis=2)
    h = jnp.maximum(s @ w1.T + b1, 0.0)
    g = jax.nn.sigmoid(h @ w2.T + b2)
    return (x.astype(jnp.float32) * g[:, :, None]).astype(x.dtype)


if __name__ == "__main__":
    # Module config (mirrors SE(Cin, Cout) with Cin == Cout)
    B, C, L = 2, 16, 32
    Cin = Cout = C
    H = max(Cout // 16, 4)  # num_hidden

    key = jax.random.PRNGKey(0)
    kx, k1, k2, k3, k4 = jax.random.split(key, 5)

    x = jax.random.normal(kx, (B, Cin, L), dtype=jnp.float32)
    # Deterministic synthetic parameter init (Linear-like scale)
    w1 = jax.random.normal(k1, (H, Cin), dtype=jnp.float32) * (1.0 / jnp.sqrt(Cin))
    b1 = jax.random.normal(k2, (H,), dtype=jnp.float32) * 0.01
    w2 = jax.random.normal(k3, (Cout, H), dtype=jnp.float32) * (1.0 / jnp.sqrt(H))
    b2 = jax.random.normal(k4, (Cout,), dtype=jnp.float32) * 0.01

    out = se_forward(x, w1, b1, w2, b2)
    out = jax.block_until_ready(out)

    ref = se_reference(x, w1, b1, w2, b2)
    assert out.shape == (B, Cin, L)
    # f32 path matches tightly; sub-f32 dtypes intentionally multiply in native
    # dtype (looser tolerance would be needed there).
    assert jnp.allclose(out, ref, atol=1e-5, rtol=1e-5), "mismatch vs reference"

    print("KERNEL_OK")
</pallas_src>

<mosaic_0001>
module attributes {stable_mosaic.version = 11 : i64} {
  func.func @_fused_kernel(%arg0: i32, %arg1: memref<1x16x32xf32, #tpu.memory_space<vmem>>, %arg2: memref<16x4xf32, #tpu.memory_space<vmem>>, %arg3: memref<1x4xf32, #tpu.memory_space<vmem>>, %arg4: memref<4x16xf32, #tpu.memory_space<vmem>>, %arg5: memref<1x16xf32, #tpu.memory_space<vmem>>, %arg6: memref<1x16x32xf32, #tpu.memory_space<vmem>>) attributes {dimension_semantics = [#tpu.dimension_semantics<parallel>], iteration_bounds = array<i64: 2>, scalar_prefetch = 0 : i64, scratch_operands = 0 : i64, tpu.core_type = #tpu.core_type<tc>, window_params = [{transform_indices = @transform_0, window_bounds = array<i64: 1, 16, 32>}, {pipeline_mode = #tpu.pipeline_mode<synchronous>, transform_indices = @transform_1, window_bounds = array<i64: 16, 4>}, {pipeline_mode = #tpu.pipeline_mode<synchronous>, transform_indices = @transform_2, window_bounds = array<i64: 1, 4>}, {pipeline_mode = #tpu.pipeline_mode<synchronous>, transform_indices = @transform_3, window_bounds = array<i64: 4, 16>}, {pipeline_mode = #tpu.pipeline_mode<synchronous>, transform_indices = @transform_4, window_bounds = array<i64: 1, 16>}, {transform_indices = @transform_5, window_bounds = array<i64: 1, 16, 32>}]} {
    %c0 = arith.constant 0 : index
    %c0_0 = arith.constant 0 : index
    %c0_1 = arith.constant 0 : index
    %0 = vector.load %arg1[%c0, %c0_0, %c0_1] : memref<1x16x32xf32, #tpu.memory_space<vmem>>, vector<1x16x32xf32>
    %cst = arith.constant dense<0.000000e+00> : vector<1x16xf32>
    %1 = vector.multi_reduction <add>, %0, %cst [2] : vector<1x16x32xf32> to vector<1x16xf32>
    %c0_2 = arith.constant 0 : index
    %c0_3 = arith.constant 0 : index
    %2 = vector.load %arg2[%c0_2, %c0_3] : memref<16x4xf32, #tpu.memory_space<vmem>>, vector<16x4xf32>
    %cst_4 = arith.constant dense<0.000000e+00> : vector<1x4xf32>
    %3 = tpu.matmul %1, %2, %cst_4 {dimension_numbers = #tpu.dot_dimension_numbers<[1], [0], [0], [1], [0, 0, 1, 1], [], []>} : vector<1x16xf32>, vector<16x4xf32>, vector<1x4xf32> -> vector<1x4xf32>
    %c0_5 = arith.constant 0 : index
    %c0_6 = arith.constant 0 : index
    %4 = vector.load %arg3[%c0_5, %c0_6] : memref<1x4xf32, #tpu.memory_space<vmem>>, vector<1x4xf32>
    %5 = arith.addf %3, %4 : vector<1x4xf32>
    %cst_7 = arith.constant 0.000000e+00 : f32
    %6 = vector.broadcast %cst_7 : f32 to vector<1x4xf32>
    %7 = arith.maximumf %5, %6 : vector<1x4xf32>
    %c0_8 = arith.constant 0 : index
    %c0_9 = arith.constant 0 : index
    %8 = vector.load %arg4[%c0_8, %c0_9] : memref<4x16xf32, #tpu.memory_space<vmem>>, vector<4x16xf32>
    %cst_10 = arith.constant dense<0.000000e+00> : vector<1x16xf32>
    %9 = tpu.matmul %7, %8, %cst_10 {dimension_numbers = #tpu.dot_dimension_numbers<[1], [0], [0], [1], [0, 0, 1, 1], [], []>} : vector<1x4xf32>, vector<4x16xf32>, vector<1x16xf32> -> vector<1x16xf32>
    %c0_11 = arith.constant 0 : index
    %c0_12 = arith.constant 0 : index
    %10 = vector.load %arg5[%c0_11, %c0_12] : memref<1x16xf32, #tpu.memory_space<vmem>>, vector<1x16xf32>
    %11 = arith.addf %9, %10 : vector<1x16xf32>
    %12 = arith.negf %11 : vector<1x16xf32>
    %13 = math.exp %12 : vector<1x16xf32>
    %cst_13 = arith.constant 1.000000e+00 : f32
    %14 = vector.broadcast %cst_13 : f32 to vector<1x16xf32>
    %15 = arith.addf %14, %13 : vector<1x16xf32>
    %16 = arith.divf %14, %15 : vector<1x16xf32>
    %17 = vector.shape_cast %16 : vector<1x16xf32> to vector<1x16x1xf32>
    %18 = vector.broadcast %17 : vector<1x16x1xf32> to vector<1x16x32xf32>
    %19 = arith.mulf %0, %18 : vector<1x16x32xf32>
    %c0_14 = arith.constant 0 : index
    %c0_15 = arith.constant 0 : index
    %c0_16 = arith.constant 0 : index
    %20 = vector.load %arg6[%c0_14, %c0_15, %c0_16] : memref<1x16x32xf32, #tpu.memory_space<vmem>>, vector<1x16x32xf32>
    tpu.vector_store %arg6[%c0_14, %c0_15, %c0_16], %19 {strides = array<i32>} : memref<1x16x32xf32, #tpu.memory_space<vmem>>, vector<1x16x32xf32>,
    return
  }
  func.func @transform_0(%arg0: i32) -> (i32, i32, i32) {
    %c0_i32 = arith.constant 0 : i32
    %c0_i32_0 = arith.constant 0 : i32
    %c0_i32_1 = arith.constant 0 : i32
    return %arg0, %c0_i32, %c0_i32_0 : i32, i32, i32
  }
  func.func @transform_1(%arg0: i32) -> (i32, i32) {
    %c0_i32 = arith.constant 0 : i32
    %c0_i32_0 = arith.constant 0 : i32
    %c0_i32_1 = arith.constant 0 : i32
    return %c0_i32, %c0_i32_0 : i32, i32
  }
  func.func @transform_2(%arg0: i32) -> (i32, i32) {
    %c0_i32 = arith.constant 0 : i32
    %c0_i32_0 = arith.constant 0 : i32
    %c0_i32_1 = arith.constant 0 : i32
    return %c0_i32, %c0_i32_0 : i32, i32
  }
  func.func @transform_3(%arg0: i32) -> (i32, i32) {
    %c0_i32 = arith.constant 0 : i32
    %c0_i32_0 = arith.constant 0 : i32
    %c0_i32_1 = arith.constant 0 : i32
    return %c0_i32, %c0_i32_0 : i32, i32
  }
  func.func @transform_4(%arg0: i32) -> (i32, i32) {
    %c0_i32 = arith.constant 0 : i32
    %c0_i32_0 = arith.constant 0 : i32
    %c0_i32_1 = arith.constant 0 : i32
    return %c0_i32, %c0_i32_0 : i32, i32
  }
  func.func @transform_5(%arg0: i32) -> (i32, i32, i32) {
    %c0_i32 = arith.constant 0 : i32
    %c0_i32_0 = arith.constant 0 : i32
    %c0_i32_1 = arith.constant 0 : i32
    return %arg0, %c0_i32, %c0_i32_0 : i32, i32, i32
  }
}

</mosaic_0001>

<llo_original>
// kernel: tpu_custom_call.1
$region0: #{tpu_custom_call.1}
  #allocation0 [shape = 'u32[]', space=smem, size = 0x4, offset = 0x4, fixed_abs, tag = 'smem constant byte address 0x4 - core index']
  #allocation1 [shape = 'u32[72,128]{1,0:T(1,128)}', space=vmem, size = 0x9000, scoped, tag = 'internal scratch']
  %s0 = inlined_call_operand.hbm [shape: f32[2,16,32], index: 0, kind: input, shape index: {}]
  %s1 = inlined_call_operand.vmem [shape: f32[16,4], index: 1, kind: input, shape index: {}]
  %s2 = inlined_call_operand.vmem [shape: f32[1,4], index: 2, kind: input, shape index: {}]
  %s3 = inlined_call_operand.vmem [shape: f32[4,16], index: 3, kind: input, shape index: {}]
  %s4 = inlined_call_operand.vmem [shape: f32[1,16], index: 4, kind: input, shape index: {}]
  %s5 = inlined_call_operand.hbm [shape: f32[2,16,32], index: 5, kind: output, shape index: {}]
  %s6 = sld [smem:[#allocation0]]
  $region57: #{tpu_custom_call.1} parent=0
    _
  %s8 = ssub.s32 1, %s6
  %s9 = scalar_select 0, %s8, %s6
  $region1: #{tpu_custom_call.1} parent=0
    #allocation2 [shape = 'u8[16384]{0}', space=vmem, size = 0x4000, scoped, tag = 'input window, operand 0']
    #allocation3 [shape = 's32[2]{0}', space=sflag, size = 0x8, scoped, tag = 'scoped memory for tpu_custom_call.1']
    #allocation4 [shape = 's32[2]{0}', space=sflag, size = 0x8, scoped, tag = 'scoped memory for tpu_custom_call.1']
    #allocation5 [shape = 'u8[16384]{0}', space=vmem, size = 0x4000, scoped, tag = 'output window, operand 0']
    %10 = vsyncpa [#allocation3], 0
    %s11 = scalar_lea.sflag [#allocation3], 1
    %12 = vsyncpa %s11, 0
    %13 = vsyncpa [#allocation4], 0
    %s14 = scalar_lea.sflag [#allocation4], 1
    %15 = vsyncpa %s14, 0
    loop: start=0, step=1, limit=4
    $region2: #{tpu_custom_call.1} parent=1 // loop_pre_header
      _
    $region3: #{tpu_custom_call.1} parent=1 // loop_header
      %s17 = sphi 0, %s21
      %p18 = scmp.ge.s32.totalorder %s17, 4
      %s27 = sphi 0, %s29
      %s30 = sphi 0, %s27
      %s31 = sphi 0, %s30
      %s47 = sphi 0, %s31
      %s51 = sphi 0, %s51
      %s53 = sphi 0, %s51
      %s54 = sphi 0, %s53
      %s68 = sphi 0, %s54
      %s72 = sphi 0, %s72
      %s74 = sphi 0, %s72
      %s75 = sphi 0, %s74
      %s89 = sphi 0, %s75
      %s93 = sphi 0, %s93
      %s95 = sphi 0, %s93
      %s96 = sphi 0, %s95
      %s110 = sphi 0, %s96
      %s114 = sphi 0, %s114
      %s116 = sphi 0, %s114
      %s117 = sphi 0, %s116
      %s131 = sphi 0, %s117
      %s137 = sphi 0, %s139
      %s140 = sphi 0, %s137
      %s141 = sphi 0, %s140
      %s157 = sphi 0, %s141
    $region4: #{tpu_custom_call.1} parent=1 // loop_header_branch
      %20 = sbr.rel (%p18) target = $region8
    $region5: #{tpu_custom_call.1} parent=1 // loop_body
      %s22 = ssub.s32 %s17, 1
      %s23 = ssub.s32 %s17, 2
      %s24 = sadd.s32 %s17, 1
      %s25 = ssub.s32 %s17, %s24
      %p26 = scmp.eq.s32.totalorder %s25, 0
      %s28 = sadd.s32 %s27, 1
      %s29 = scalar_select %p26, %s27, %s28
      %p32 = pneg %p26
      %p33 = scmp.eq.s32.totalorder %s17, 1
      %p34 = por %p32, %p33
      %p35 = scmp.ne.s32.totalorder %s27, %s30
      %p36 = scmp.eq.s32.totalorder %s17, 0
      %p37 = por %p35, %p36
      %p38 = scmp.ne.s32.totalorder %s27, %s30
      %p39 = scmp.eq.s32.totalorder %s22, 1
      %p40 = por %p38, %p39
      %p41 = scmp.ne.s32.totalorder %s30, %s31
      %p42 = scmp.eq.s32.totalorder %s22, 0
      %p43 = por %p41, %p42
      %p44 = scmp.ne.s32.totalorder %s30, %s31
      %p45 = scmp.eq.s32.totalorder %s23, 1
      %p46 = por %p44, %p45
      %p48 = scmp.ne.s32.totalorder %s31, %s47
      %p49 = scmp.eq.s32.totalorder %s23, 0
      %p50 = por %p48, %p49
      %s52 = sadd.s32 %s51, 1
      %p55 = scmp.eq.s32.totalorder %s17, 1
      %p56 = scmp.ne.s32.totalorder %s51, %s53
      %p57 = scmp.eq.s32.totalorder %s17, 0
      %p58 = por %p56, %p57
      %p59 = scmp.ne.s32.totalorder %s51, %s53
      %p60 = scmp.eq.s32.totalorder %s22, 1
      %p61 = por %p59, %p60
      %p62 = scmp.ne.s32.totalorder %s53, %s54
      %p63 = scmp.eq.s32.totalorder %s22, 0
      %p64 = por %p62, %p63
      %p65 = scmp.ne.s32.totalorder %s53, %s54
      %p66 = scmp.eq.s32.totalorder %s23, 1
      %p67 = por %p65, %p66
      %p69 = scmp.ne.s32.totalorder %s54, %s68
      %p70 = scmp.eq.s32.totalorder %s23, 0
      %p71 = por %p69, %p70
      %s73 = sadd.s32 %s72, 1
      %p76 = scmp.eq.s32.totalorder %s17, 1
      %p77 = scmp.ne.s32.totalorder %s72, %s74
      %p78 = scmp.eq.s32.totalorder %s17, 0
      %p79 = por %p77, %p78
      %p80 = scmp.ne.s32.totalorder %s72, %s74
      %p81 = scmp.eq.s32.totalorder %s22, 1
      %p82 = por %p80, %p81
      %p83 = scmp.ne.s32.totalorder %s74, %s75
      %p84 = scmp.eq.s32.totalorder %s22, 0
      %p85 = por %p83, %p84
      %p86 = scmp.ne.s32.totalorder %s74, %s75
      %p87 = scmp.eq.s32.totalorder %s23, 1
      %p88 = por %p86, %p87
      %p90 = scmp.ne.s32.totalorder %s75, %s89
      %p91 = scmp.eq.s32.totalorder %s23, 0
      %p92 = por %p90, %p91
      %s94 = sadd.s32 %s93, 1
      %p97 = scmp.eq.s32.totalorder %s17, 1
      %p98 = scmp.ne.s32.totalorder %s93, %s95
      %p99 = scmp.eq.s32.totalorder %s17, 0
      %p100 = por %p98, %p99
      %p101 = scmp.ne.s32.totalorder %s93, %s95
      %p102 = scmp.eq.s32.totalorder %s22, 1
      %p103 = por %p101, %p102
      %p104 = scmp.ne.s32.totalorder %s95, %s96
      %p105 = scmp.eq.s32.totalorder %s22, 0
      %p106 = por %p104, %p105
      %p107 = scmp.ne.s32.totalorder %s95, %s96
      %p108 = scmp.eq.s32.totalorder %s23, 1
      %p109 = por %p107, %p108
      %p111 = scmp.ne.s32.totalorder %s96, %s110
      %p112 = scmp.eq.s32.totalorder %s23, 0
      %p113 = por %p111, %p112
      %s115 = sadd.s32 %s114, 1
      %p118 = scmp.eq.s32.totalorder %s17, 1
      %p119 = scmp.ne.s32.totalorder %s114, %s116
      %p120 = scmp.eq.s32.totalorder %s17, 0
      %p121 = por %p119, %p120
      %p122 = scmp.ne.s32.totalorder %s114, %s116
      %p123 = scmp.eq.s32.totalorder %s22, 1
      %p124 = por %p122, %p123
      %p125 = scmp.ne.s32.totalorder %s116, %s117
      %p126 = scmp.eq.s32.totalorder %s22, 0
      %p127 = por %p125, %p126
      %p128 = scmp.ne.s32.totalorder %s116, %s117
      %p129 = scmp.eq.s32.totalorder %s23, 1
      %p130 = por %p128, %p129
      %p132 = scmp.ne.s32.totalorder %s117, %s131
      %p133 = scmp.eq.s32.totalorder %s23, 0
      %p134 = por %p132, %p133
      %s135 = ssub.s32 %s17, %s24
      %p136 = scmp.eq.s32.totalorder %s135, 0
      %s138 = sadd.s32 %s137, 1
      %s139 = scalar_select %p136, %s137, %s138
      %p142 = pneg %p136
      %p143 = scmp.eq.s32.totalorder %s17, 1
      %p144 = por %p142, %p143
      %p145 = scmp.ne.s32.totalorder %s137, %s140
      %p146 = scmp.eq.s32.totalorder %s17, 0
      %p147 = por %p145, %p146
      %p148 = scmp.ne.s32.totalorder %s137, %s140
      %p149 = scmp.eq.s32.totalorder %s22, 1
      %p150 = por %p148, %p149
      %p151 = scmp.ne.s32.totalorder %s140, %s141
      %p152 = scmp.eq.s32.totalorder %s22, 0
      %p153 = por %p151, %p152
      %p154 = scmp.ne.s32.totalorder %s140, %s141
      %p155 = scmp.eq.s32.totalorder %s23, 1
      %p156 = por %p154, %p155
      %p158 = scmp.ne.s32.totalorder %s141, %s157
      %p159 = scmp.eq.s32.totalorder %s23, 0
      %p160 = por %p158, %p159
      %p161 = scmp.le.s32.totalorder 1, %s17
      %p162 = scmp.lt.s32.totalorder %s17, 3
      %p163 = pnand %p161, %p162
      %p164 = pneg %p163
      // Predicated region
      $region9: #{tpu_custom_call.1} parent=5 // pred_check
        _
      $region10: #{tpu_custom_call.1} parent=5 // pred_check_branch
        %166 = sbr.rel (%p163) target = $region12
      $region11: #{tpu_custom_call.1} parent=5 // pred_region
        %s167 = ssub.s32 %s17, 1
        // Predicated region
        $region13: #{tpu_custom_call.1} parent=11 // pred_check
          %p168 = pneg %p64
        $region14: #{tpu_custom_call.1} parent=11 // pred_check_branch
          %170 = sbr.rel (%p168) target = $region16
        $region15: #{tpu_custom_call.1} parent=11 // pred_region
          _
        $region16: #{tpu_custom_call.1} parent=11 // pred_fallthru
          _
        // Predicated region
        $region17: #{tpu_custom_call.1} parent=11 // pred_check
          %p171 = pneg %p85
        $region18: #{tpu_custom_call.1} parent=11 // pred_check_branch
          %173 = sbr.rel (%p171) target = $region20
        $region19: #{tpu_custom_call.1} parent=11 // pred_region
          _
        $region20: #{tpu_custom_call.1} parent=11 // pred_fallthru
          _
        // Predicated region
        $region21: #{tpu_custom_call.1} parent=11 // pred_check
          %p174 = pneg %p106
        $region22: #{tpu_custom_call.1} parent=11 // pred_check_branch
          %176 = sbr.rel (%p174) target = $region24
        $region23: #{tpu_custom_call.1} parent=11 // pred_region
          _
        $region24: #{tpu_custom_call.1} parent=11 // pred_fallthru
          _
        // Predicated region
        $region25: #{tpu_custom_call.1} parent=11 // pred_check
          %p177 = pneg %p127
        $region26: #{tpu_custom_call.1} parent=11 // pred_check_branch
          %179 = sbr.rel (%p177) target = $region28
        $region27: #{tpu_custom_call.1} parent=11 // pred_region
          _
        $region28: #{tpu_custom_call.1} parent=11 // pred_fallthru
          _
      $region12: #{tpu_custom_call.1} parent=5 // pred_fallthru
        _
      %p180 = scmp.lt.s32.totalorder %s17, 2
      // Predicated region
      $region29: #{tpu_custom_call.1} parent=5 // pred_check
        %p181 = pneg %p180
      $region30: #{tpu_custom_call.1} parent=5 // pred_check_branch
        %183 = sbr.rel (%p181) target = $region32
      $region31: #{tpu_custom_call.1} parent=5 // pred_region
        // Predicated region
        $region33: #{tpu_custom_call.1} parent=31 // pred_check
          %p184 = pneg %p37
        $region34: #{tpu_custom_call.1} parent=31 // pred_check_branch
          %186 = sbr.rel (%p184) target = $region36
        $region35: #{tpu_custom_call.1} parent=31 // pred_region
          %s187 = sand.u32 %s27, 1
          %s188 = scalar_lea.sflag [#allocation3], %s187
          %s189 = sand.u32 %s27, 1
          %s190 = smul.addr %s189, 16
          %s191 = scalar_lea.vmem [#allocation2], %s190
          %193 = vsyncadd %s188, 0
          %s194 = smul.addr %s17, 2
          %s195 = smul.addr %s194, 8
          %s196 = scalar_lea.hbm %s0, %s195
          %s197 = sshll.u32 %s196, 4
          %s198 = int_to_ptr.hbm [resolvable:$true] %s197
          %s199 = sshll.u32 %s191, 4
          %s200 = int_to_ptr.vmem [resolvable:$true] %s199
          %205 = dma.hbm_to_vmem [thread:$0]  %s198, 256, %s200, %s188, 128, 128, 8
        $region36: #{tpu_custom_call.1} parent=31 // pred_fallthru
          _
      $region32: #{tpu_custom_call.1} parent=5 // pred_fallthru
        _
      %p206 = scmp.le.s32.totalorder 1, %s17
      %p207 = scmp.lt.s32.totalorder %s17, 3
      %p208 = pnand %p206, %p207
      %p209 = pneg %p208
      // Predicated region
      $region37: #{tpu_custom_call.1} parent=5 // pred_check
        _
      $region38: #{tpu_custom_call.1} parent=5 // pred_check_branch
        %211 = sbr.rel (%p208) target = $region40
      $region39: #{tpu_custom_call.1} parent=5 // pred_region
        %s212 = ssub.s32 %s17, 1
        %s213 = sand.u32 %s30, 1
        %s214 = scalar_lea.sflag [#allocation3], %s213
        %s215 = sand.u32 %s30, 1
        %s216 = smul.addr %s215, 16
        %s217 = scalar_lea.vmem [#allocation2], %s216
        // Predicated region
        $region41: #{tpu_custom_call.1} parent=39 // pred_check
          %p218 = pneg %p43
        $region42: #{tpu_custom_call.1} parent=39 // pred_check_branch
          %220 = sbr.rel (%p218) target = $region44
        $region43: #{tpu_custom_call.1} parent=39 // pred_region
          %222 = dma.done %s214, 256
        $region44: #{tpu_custom_call.1} parent=39 // pred_fallthru
          _
        %s223 = sand.u32 %s30, 1
        %s224 = scalar_lea.sflag [#allocation3], %s223
        %s225 = sand.u32 %s30, 1
        %s226 = smul.addr %s225, 16
        %s227 = scalar_lea.vmem [#allocation2], %s226
        %p228 = pneg %p43
        %p229 = pneg %p40
        %p230 = pneg %p64
        %p231 = pneg %p61
        %p232 = pneg %p85
        %p233 = pneg %p82
        %p234 = pneg %p106
        %p235 = pneg %p103
        %p236 = pneg %p127
        %p237 = pneg %p124
        %p238 = pneg %p153
        %p239 = pneg %p150
        %s240 = sand.u32 %s140, 1
        %s241 = scalar_lea.sflag [#allocation4], %s240
        %s242 = sand.u32 %s140, 1
        %s243 = smul.addr %s242, 16
        %s244 = scalar_lea.vmem [#allocation5], %s243
        %v245 = vld [vmem:[%s217] sm:$0xff]
        %v246 = vld [vmem:[%s217 + $0x8] sm:$0xff]
        %vm247 = vcmask 261120
        %v248 = vsel %vm247, %v245, 0.0
        %249 = vadd.xlane.f32.xlu0 %v248
        %v250 = vpop.xlane.xlu0 %249
        %v251 = vsel %vm247, %v246, 0.0
        %252 = vadd.xlane.f32.xlu0 %v251
        %v253 = vpop.xlane.xlu0 %252
        %v254 = vld [vmem:[%s1] sm:$0xff]
        %v255 = vld [vmem:[%s1 + $0x8] sm:$0xff]
        %v256 = vld [vmem:[%s2] sm:$0x1]
        %v259 = vlaneseq
        %v260 = vand.u32 %v259, 127
        %v261 = vperm.slane %v250, %v260
        %v262 = vadd.s32 %v260, 4294967288
        %v263 = vperm.slane %v253, %v262
        %vm264 = vcmask 130112
        %v265 = vsel %vm264, %v263, %v261
        %vm266 = vcmask 130048
        %v267 = vsel %vm266, %v265, 0
        %269 = vmatpush.msra.mxu0 0.0
        %270 = vmatpush.msra.mxu0 0.0
        %271 = vmatpush.msra.mxu0 0.0
        %272 = vmatpush.msra.mxu0 0.0
        %273 = vmatpush.msra.mxu0 0.0
        %274 = vmatpush.msra.mxu0 0.0
        %275 = vmatpush.msra.mxu0 0.0
        %276 = vmatpush.msra.mxu0 0.0
        %277 = vmatpush.msra.mxu0 0.0
        %278 = vmatpush.msra.mxu0 0.0
        %279 = vmatpush.msra.mxu0 0.0
        %280 = vmatpush.msra.mxu0 0.0
        %281 = vmatpush.msra.mxu0 0.0
        %282 = vmatpush.msra.mxu0 0.0
        %283 = vmatpush.msra.mxu0 %v255
        %284 = vmatpush.msra.mxu0 %v254
        %285 = vmatmul.f32.gmra.mxu0 %v267
        %v286 = vpop.f32.mrf.mxu0
        %v287 = vadd.f32 %v256, %v286
        %288 = vdwg.mxu0
        %v289 = vmax.f32 %v287, 0.0
        %v290 = vld [vmem:[%s3] sm:$0xf]
        %v291 = vld [vmem:[%s4] sm:$0x1]
        %vm292 = vcmask 31744
        %v294 = vsel %vm292, %v289, 0
        %vm296 = vcmask 1043456
        %v298 = vsel %vm296, %v290, 0
        %300 = vmatpush.msra.mxu0 0.0
        %301 = vmatpush.msra.mxu0 0.0
        %302 = vmatpush.msra.mxu0 0.0
        %303 = vmatpush.msra.mxu0 0.0
        %304 = vmatpush.msra.mxu0 0.0
        %305 = vmatpush.msra.mxu0 0.0
        %306 = vmatpush.msra.mxu0 0.0
        %307 = vmatpush.msra.mxu0 0.0
        %308 = vmatpush.msra.mxu0 0.0
        %309 = vmatpush.msra.mxu0 0.0
        %310 = vmatpush.msra.mxu0 0.0
        %311 = vmatpush.msra.mxu0 0.0
        %312 = vmatpush.msra.mxu0 0.0
        %313 = vmatpush.msra.mxu0 0.0
        %314 = vmatpush.msra.mxu0 0.0
        %315 = vmatpush.msra.mxu0 %v298
        %316 = vmatmul.f32.gmra.mxu0 %v294
        %v317 = vpop.f32.mrf.mxu0
        %v318 = vadd.f32 %v291, %v317
        %319 = vdwg.mxu0
        %v320 = vxor.u32 %v318, 2147483648
        %v321 = vmul.f32 %v320, 1.442695
        %v322 = vpow.pop %v321
        %v323 = vadd.f32 %v322, 1.0
        %v324 = vrcp.pop %v323
        %v325 = vmul.f32 %v323, %v324
        %v326 = vsub.f32 1.0, %v325
        %v327 = vmul.f32 %v324, %v326
        %v328 = vadd.f32 %v324, %v327
        %vm329 = vweird.f32 %v323
        %vm330 = vweird.f32 %v324
        %vm331 = vmor %vm329, %vm330
        %v332 = vsel %vm331, %v324, %v328
        %v333 = vand.u32 2147483647, %v323
        %vm334 = vcmp.eq.f32.partialorder %v333, 8.507059e+37
        %v335 = vand.u32 %v323, 2147483648
        %v336 = vor.u32 1.1754944e-38, %v335
        %v337 = vsel %vm334, %v336, %v332
        %v338 = vmul.f32 1.0, %v337
        %v339 = vperm.slane %v338, 0
        %v340 = vlaneseq
        %v341 = vshrl.u32 %v340, 7
        %343 = vset.pattern.permute.xlu0 %v341
        %344 = vperm.xlu0 %343, %v339
        %v345 = vpop.permute.xlu0 %344
        %v346 = vlaneseq
        %v347 = vshrl.u32 %v346, 7
        %v348 = vadd.s32 %v347, 8
        %349 = vset.pattern.permute.xlu0 %v348
        %350 = vperm.xlu0 %349, %v339
        %v351 = vpop.permute.xlu0 %350
        %v352 = vmul.f32 %v245, %v345
        %v353 = vmul.f32 %v246, %v351
        %354 = vst.msk [vmem:[%s244] sm:$0xff] %vm247, %v352
        %355 = vst.msk [vmem:[%s244 + $0x8] sm:$0xff] %vm247, %v353
        %s356 = sand.u32 %s140, 1
        %s357 = scalar_lea.sflag [#allocation4], %s356
        %s358 = sand.u32 %s140, 1
        %s359 = smul.addr %s358, 16
        %s360 = scalar_lea.vmem [#allocation5], %s359
        // Predicated region
        $region45: #{tpu_custom_call.1} parent=39 // pred_check
          %p361 = pneg %p150
        $region46: #{tpu_custom_call.1} parent=39 // pred_check_branch
          %363 = sbr.rel (%p361) target = $region48
        $region47: #{tpu_custom_call.1} parent=39 // pred_region
          %365 = vsyncadd %s357, 0
          %s366 = smul.addr %s22, 2
          %s367 = smul.addr %s366, 8
          %s368 = scalar_lea.hbm %s5, %s367
          %s369 = sshll.u32 %s360, 4
          %s370 = int_to_ptr.vmem [resolvable:$true] %s369
          %s371 = sshll.u32 %s368, 4
          %s372 = int_to_ptr.hbm [resolvable:$true] %s371
          %377 = dma.vmem_to_hbm [thread:$0]  %s370, 256, %s372, %s357, 128, 128, 8
        $region48: #{tpu_custom_call.1} parent=39 // pred_fallthru
          _
      $region40: #{tpu_custom_call.1} parent=5 // pred_fallthru
        _
      %p378 = scmp.le.s32.totalorder 2, %s17
      // Predicated region
      $region49: #{tpu_custom_call.1} parent=5 // pred_check
        %p379 = pneg %p378
      $region50: #{tpu_custom_call.1} parent=5 // pred_check_branch
        %381 = sbr.rel (%p379) target = $region52
      $region51: #{tpu_custom_call.1} parent=5 // pred_region
        %s382 = ssub.s32 %s17, 2
        // Predicated region
        $region53: #{tpu_custom_call.1} parent=51 // pred_check
          %p383 = pneg %p156
        $region54: #{tpu_custom_call.1} parent=51 // pred_check_branch
          %385 = sbr.rel (%p383) target = $region56
        $region55: #{tpu_custom_call.1} parent=51 // pred_region
          %s386 = sand.u32 %s141, 1
          %s387 = scalar_lea.sflag [#allocation4], %s386
          %s388 = sand.u32 %s141, 1
          %s389 = smul.addr %s388, 16
          %s390 = scalar_lea.vmem [#allocation5], %s389
          %392 = dma.done %s387, 256
        $region56: #{tpu_custom_call.1} parent=51 // pred_fallthru
          _
      $region52: #{tpu_custom_call.1} parent=5 // pred_fallthru
        _
    $region6: #{tpu_custom_call.1} parent=1 // loop_footer
      %s21 = sadd.s32 1, %s17
    $region7: #{tpu_custom_call.1} parent=1 // loop_footer_branch
      %16 = sbr.rel target = $region3
    $region8: #{tpu_custom_call.1} parent=1 // loop_exit
      _
    %393 = vsyncpa [#allocation3], 1
    %s394 = scalar_lea.sflag [#allocation3], 1
    %395 = vsyncpa %s394, 1
    %396 = vsyncpa [#allocation4], 1
    %s397 = scalar_lea.sflag [#allocation4], 1
    %398 = vsyncpa %s397, 1

</llo_original>
